<compile_context>
chip_gen: v5e
topology: v5e:2x2
jax: 0.10.0
libtpu: 0.0.40
codegen_flags: <defaults>
</compile_context>

<pallas_src>
import functools
import numpy as np
import jax
import jax.numpy as jnp
from jax.experimental import pallas as pl
from jax.experimental.pallas import tpu as pltpu

TRUNCATED_NORMAL_STDDEV_FACTOR = np.float32(0.8796256610342398)


def _cdiv(a, b):
    return (a + b - 1) // b


def _round_up(x, m):
    return _cdiv(x, m) * m


def _sublane_multiple(dtype):
    # Minimum second-to-last tile dim per dtype packing (f32:8, bf16:16, int8/fp8:32).
    return {4: 8, 2: 16, 1: 32}.get(jnp.dtype(dtype).itemsize, 8)


def _vmem_budget_bytes():
    """Per-generation VMEM working budget (leaves headroom under the physical cap)."""
    phys = 64 * 2**20  # conservative default: assume v7x (64 MiB / TensorCore)
    try:
        info = pltpu.get_tpu_info()
        for attr in ("vmem_capacity_bytes", "vmem_size_bytes", "vmem_bytes"):
            v = getattr(info, attr, None)
            if v:
                phys = int(v)
                break
    except Exception:
        pass
    if phys >= 100 * 2**20:                    # v5e / v6e: 128 MiB physical
        return 96 * 2**20
    return min(48 * 2**20, (phys * 3) // 4)    # v7x: leave headroom under 64 MiB


# ---------------------------------------------------------------------------
# Kernels
# ---------------------------------------------------------------------------
def _fast_kernel(*refs, add_bias, precision):
    """1-D grid over M; resident full-K/full-N weight; single-shot dot + bias."""
    if add_bias:
        x_ref, w_ref, b_ref, o_ref = refs
    else:
        x_ref, w_ref, o_ref = refs
        b_ref = None
    acc = jnp.dot(x_ref[...], w_ref[...],
                  preferred_element_type=jnp.float32, precision=precision)
    if b_ref is not None:
        acc = acc + b_ref[...].astype(jnp.float32)   # (1, N) broadcast over rows
    o_ref[...] = acc.astype(o_ref.dtype)


def _tiled_kernel_acc(*refs, add_bias, precision):
    """3-D grid; f32 accumulator scratch (for bf16 / low-precision outputs)."""
    if add_bias:
        x_ref, w_ref, b_ref, o_ref, acc_ref = refs
    else:
        x_ref, w_ref, o_ref, acc_ref = refs
        b_ref = None
    k = pl.program_id(2)

    @pl.when(k == 0)
    def _init():
        acc_ref[...] = jnp.zeros_like(acc_ref)

    acc_ref[...] += jnp.dot(x_ref[...], w_ref[...],
                            preferred_element_type=jnp.float32, precision=precision)

    @pl.when(k == pl.num_programs(2) - 1)
    def _finalize():
        acc = acc_ref[...]
        if b_ref is not None:
            acc = acc + b_ref[...].astype(jnp.float32)
        o_ref[...] = acc.astype(o_ref.dtype)


def _tiled_kernel_f32out(*refs, add_bias, precision):
    """3-D grid; f32 output -> accumulate directly into o_ref (no scratch)."""
    if add_bias:
        x_ref, w_ref, b_ref, o_ref = refs
    else:
        x_ref, w_ref, o_ref = refs
        b_ref = None
    k = pl.program_id(2)

    @pl.when(k == 0)
    def _init():
        if b_ref is not None:
            o_ref[...] = jnp.broadcast_to(b_ref[...].astype(jnp.float32), o_ref.shape)
        else:
            o_ref[...] = jnp.zeros_like(o_ref)

    o_ref[...] += jnp.dot(x_ref[...], w_ref[...],
                          preferred_element_type=jnp.float32, precision=precision)


# ---------------------------------------------------------------------------
# Fallback tile selection (large weights only)
# ---------------------------------------------------------------------------
def _pick_tiled_tiles(M, N, K, xb, wb, ob, sub, budget):
    big = budget >= 80 * 2**20               # v5e / v6e (128 MiB physical)
    tn = min(2048 if big else 1024, _round_up(N, 128))
    tk = min(1024 if big else 512, _round_up(K, 128))
    tm = min(512, _round_up(M, sub))

    def est(tm_, tn_, tk_):
        return (2 * (tm_ * tk_ * xb + tk_ * tn_ * wb)
                + 2 * tm_ * tn_ * ob + tm_ * tn_ * 4 + 4 * tn_)

    while est(tm, tn, tk) > budget:
        if tn >= tk and tn > 128:
            tn //= 2
        elif tk > 128:
            tk //= 2
        elif tm > sub:
            tm = max(sub, (tm // 2) // sub * sub)
        else:
            break
    return tm, tn, tk


# ---------------------------------------------------------------------------
# Wrapper: y = einsum('...a, ah -> ...h', x, weight) [+ bias]
# ---------------------------------------------------------------------------
def linear_pallas(x, weight, bias=None, *, precision=None, force_tiled=False):
    """x: [..., K], weight: [K, N], bias: [N] or None -> [..., N].

    `precision=None` mirrors the module's default (MXU default precision for f32
    inputs); pass jax.lax.Precision.HIGHEST if bit-accurate f32 is required.
    """
    *batch_dims, K = x.shape
    Kw, N = weight.shape
    assert K == Kw, (K, Kw)
    M = int(np.prod(batch_dims)) if batch_dims else 1
    x2d = x.reshape(M, K)

    out_dtype = x.dtype
    xb = jnp.dtype(x.dtype).itemsize
    wb = jnp.dtype(weight.dtype).itemsize
    ob = jnp.dtype(out_dtype).itemsize
    add_bias = bias is not None
    bb = jnp.dtype(bias.dtype).itemsize if add_bias else 0
    sub = _sublane_multiple(x.dtype)
    budget = _vmem_budget_bytes()

    # -------------------- fast path: fully VMEM-resident weight --------------------
    tm_fast = None
    if not force_tiled:
        fixed = 2 * K * N * wb + (2 * N * bb if add_bias else 0)
        per_row = 2 * (K * xb + N * ob)
        if fixed + sub * per_row <= budget:
            tm_cap = (budget - fixed) // per_row
            tm_cap = max(sub, (tm_cap // sub) * sub)
            tm_fast = min(512, tm_cap, _round_up(M, sub))
            # Keep >= 2 parallel M blocks so both v7x TensorCores get work.
            if _cdiv(M, tm_fast) < 2 and _round_up(M, sub) >= 2 * sub:
                tm_fast = _round_up(_cdiv(M, 2), sub)

    if tm_fast is not None:
        tm = int(tm_fast)
        grid_m = _cdiv(M, tm)
        M_pad = grid_m * tm
        x_in = x2d if M_pad == M else jnp.pad(x2d, ((0, M_pad - M), (0, 0)))

        args = [x_in, weight]
        in_specs = [
            pl.BlockSpec((tm, K), lambda i: (i, 0)),   # activation tile (full K)
            pl.BlockSpec((K, N), lambda i: (0, 0)),    # resident weight (DMA'd once)
        ]
        if add_bias:
            args.append(bias.reshape(1, N))
            in_specs.append(pl.BlockSpec((1, N), lambda i: (0, 0)))

        kernel = functools.partial(_fast_kernel, add_bias=add_bias, precision=precision)
        cost = pl.CostEstimate(
            flops=2 * M_pad * K * N,
            transcendentals=0,
            bytes_accessed=(M_pad * K * xb + K * N * wb + M_pad * N * ob
                            + (N * bb if add_bias else 0)),
        )
        y2d = pl.pallas_call(
            kernel,
            out_shape=jax.ShapeDtypeStruct((M_pad, N), out_dtype),
            grid_spec=pltpu.PrefetchScalarGridSpec(
                num_scalar_prefetch=0,
                grid=(grid_m,),
                in_specs=in_specs,
                out_specs=pl.BlockSpec((tm, N), lambda i: (i, 0)),
            ),
            compiler_params=pltpu.CompilerParams(
                dimension_semantics=("parallel",),
                vmem_limit_bytes=int(budget),
            ),
            cost_estimate=cost,
        )(*args)
        if M_pad != M:
            y2d = y2d[:M]
        return y2d.reshape(*batch_dims, N)

    # ---------------- fallback: 3-D grid for weights that don't fit VMEM ----------------
    tm, tn, tk = _pick_tiled_tiles(M, N, K, xb, wb, ob, sub, budget)
    M_pad = _round_up(M, tm)
    N_pad = _round_up(N, tn)
    K_pad = _round_up(K, tk)

    x_in = x2d
    if M_pad != M or K_pad != K:
        x_in = jnp.pad(x2d, ((0, M_pad - M), (0, K_pad - K)))
    w_in = weight
    if K_pad != K or N_pad != N:
        w_in = jnp.pad(weight, ((0, K_pad - K), (0, N_pad - N)))

    args = [x_in, w_in]
    in_specs = [
        pl.BlockSpec((tm, tk), lambda i, j, k: (i, k)),
        pl.BlockSpec((tk, tn), lambda i, j, k: (k, j)),
    ]
    if add_bias:
        b_in = bias if N_pad == N else jnp.pad(bias, ((0, N_pad - N),))
        args.append(b_in.reshape(1, N_pad))
        in_specs.append(pl.BlockSpec((1, tn), lambda i, j, k: (0, j)))

    f32_out = jnp.dtype(out_dtype) == jnp.dtype(jnp.float32)
    if f32_out:
        kernel = functools.partial(_tiled_kernel_f32out, add_bias=add_bias,
                                   precision=precision)
        scratch_shapes = []
    else:
        kernel = functools.partial(_tiled_kernel_acc, add_bias=add_bias,
                                   precision=precision)
        scratch_shapes = [pltpu.VMEM((tm, tn), jnp.float32)]

    grid = (M_pad // tm, N_pad // tn, K_pad // tk)
    cost = pl.CostEstimate(
        flops=2 * M_pad * K_pad * N_pad,
        transcendentals=0,
        bytes_accessed=(grid[1] * M_pad * K_pad * xb      # x re-streamed per N block
                        + grid[0] * K_pad * N_pad * wb    # w re-streamed per M block
                        + M_pad * N_pad * ob),
    )
    y2d = pl.pallas_call(
        kernel,
        out_shape=jax.ShapeDtypeStruct((M_pad, N_pad), out_dtype),
        grid_spec=pltpu.PrefetchScalarGridSpec(
            num_scalar_prefetch=0,
            grid=grid,
            in_specs=in_specs,
            out_specs=pl.BlockSpec((tm, tn), lambda i, j, k: (i, j)),
            scratch_shapes=scratch_shapes,
        ),
        compiler_params=pltpu.CompilerParams(
            dimension_semantics=("parallel", "parallel", "arbitrary"),
            vmem_limit_bytes=int(budget),
        ),
        cost_estimate=cost,
    )(*args)
    y2d = y2d[:M, :N]
    return y2d.reshape(*batch_dims, N)


# ---------------------------------------------------------------------------
# Deterministic parameter initialization (mirrors _get_initializer_scale with
# truncated normal in [-2, 2]*std, std = sqrt(scale/K)/factor)
# ---------------------------------------------------------------------------
def init_linear_params(key, num_input, num_output, *, initializer="linear",
                       use_bias=False, bias_init=0.0, dtype=jnp.float32):
    if initializer == "zeros":
        weight = jnp.zeros((num_input, num_output), dtype=dtype)
    else:
        noise_scale = 1.0 / num_input
        if initializer == "relu":
            noise_scale *= 2.0
        stddev = np.sqrt(noise_scale) / TRUNCATED_NORMAL_STDDEV_FACTOR
        weight = (
            jax.random.truncated_normal(key, -2.0, 2.0, (num_input, num_output),
                                        dtype=jnp.float32) * stddev
        ).astype(dtype)
    bias = None
    if use_bias:
        bias = jnp.full((num_output,), bias_init, dtype=dtype)
    return weight, bias


# TODO(synk): the num_input_dims==0 fast_scalar_mode path (pure broadcasted
# elementwise multiply) and multi-dim in/out einsum variants are not lowered to
# a dedicated Pallas kernel here; the standard rank-1-in/rank-1-out path is.

if __name__ == "__main__":
    key = jax.random.PRNGKey(0)
    kx, kw, kx2, kw2, kx3, kw3, kx4, kw4 = jax.random.split(key, 8)

    # ---- Test 1: small AF3-style shapes with bias (fast weight-resident path) ----
    B, S, K, N = 2, 8, 32, 64
    x = jax.random.normal(kx, (B, S, K), dtype=jnp.float32)
    weight, bias = init_linear_params(kw, K, N, initializer="linear",
                                      use_bias=True, bias_init=0.0)
    y = jax.block_until_ready(linear_pallas(x, weight, bias))
    y_ref = np.einsum("...a,ah->...h", np.asarray(x), np.asarray(weight)) + np.asarray(bias)
    np.testing.assert_allclose(np.asarray(y), y_ref, rtol=2e-4, atol=2e-4)
    assert y.shape == (B, S, N) and y.dtype == x.dtype

    # ---- Test 2: bigger M, ragged K/N, no bias (fast path; no padding anywhere) ----
    B2, S2, K2, N2 = 2, 160, 600, 640
    x2 = jax.random.normal(kx2, (B2, S2, K2), dtype=jnp.float32)
    w2, _ = init_linear_params(kw2, K2, N2, initializer="relu", use_bias=False)
    y2 = jax.block_until_ready(linear_pallas(x2, w2, None))
    y2_ref = np.einsum("...a,ah->...h", np.asarray(x2), np.asarray(w2))
    np.testing.assert_allclose(np.asarray(y2), y2_ref, rtol=2e-4, atol=2e-4)
    assert y2.shape == (B2, S2, N2) and y2.dtype == x2.dtype

    # ---- Test 3: bf16 + bias + ragged dims, forced 3-D tiled path (acc scratch) ----
    B3, S3, K3, N3 = 4, 25, 200, 300
    x3 = jax.random.normal(kx3, (B3, S3, K3), dtype=jnp.float32).astype(jnp.bfloat16)
    w3f, b3f = init_linear_params(kw3, K3, N3, initializer="linear",
                                  use_bias=True, bias_init=1.0)
    w3 = w3f.astype(jnp.bfloat16)
    b3 = b3f.astype(jnp.bfloat16)
    y3 = jax.block_until_ready(linear_pallas(x3, w3, b3, force_tiled=True))
    y3_ref = (np.einsum("...a,ah->...h",
                        np.asarray(x3, dtype=np.float32),
                        np.asarray(w3, dtype=np.float32))
              + np.asarray(b3, dtype=np.float32))
    np.testing.assert_allclose(np.asarray(y3, dtype=np.float32), y3_ref,
                               rtol=5e-2, atol=5e-2)
    assert y3.shape == (B3, S3, N3) and y3.dtype == x3.dtype

    # ---- Test 4: f32, multi-step K reduction, forced tiled path (direct f32 acc) ----
    M4, K4, N4 = 40, 600, 256
    x4 = jax.random.normal(kx4, (M4, K4), dtype=jnp.float32)
    w4, _ = init_linear_params(kw4, K4, N4, initializer="linear", use_bias=False)
    y4 = jax.block_until_ready(linear_pallas(x4, w4, None, force_tiled=True))
    y4_ref = np.einsum("...a,ah->...h", np.asarray(x4), np.asarray(w4))
    np.testing.assert_allclose(np.asarray(y4), y4_ref, rtol=2e-4, atol=2e-4)
    assert y4.shape == (M4, N4) and y4.dtype == x4.dtype

    print("KERNEL_OK")
</pallas_src>

<mosaic_0001>
module attributes {stable_mosaic.version = 11 : i64} {
  func.func @_fast_kernel(%arg0: i32, %arg1: memref<8x32xf32, #tpu.memory_space<vmem>>, %arg2: memref<32x64xf32, #tpu.memory_space<vmem>>, %arg3: memref<1x64xf32, #tpu.memory_space<vmem>>, %arg4: memref<8x64xf32, #tpu.memory_space<vmem>>) attributes {dimension_semantics = [#tpu.dimension_semantics<parallel>], iteration_bounds = array<i64: 2>, scalar_prefetch = 0 : i64, scratch_operands = 0 : i64, tpu.core_type = #tpu.core_type<tc>, window_params = [{transform_indices = @transform_0, window_bounds = array<i64: 8, 32>}, {pipeline_mode = #tpu.pipeline_mode<synchronous>, transform_indices = @transform_1, window_bounds = array<i64: 32, 64>}, {pipeline_mode = #tpu.pipeline_mode<synchronous>, transform_indices = @transform_2, window_bounds = array<i64: 1, 64>}, {transform_indices = @transform_3, window_bounds = array<i64: 8, 64>}]} {
    %c0 = arith.constant 0 : index
    %c0_0 = arith.constant 0 : index
    %0 = vector.load %arg1[%c0, %c0_0] : memref<8x32xf32, #tpu.memory_space<vmem>>, vector<8x32xf32>
    %c0_1 = arith.constant 0 : index
    %c0_2 = arith.constant 0 : index
    %1 = vector.load %arg2[%c0_1, %c0_2] : memref<32x64xf32, #tpu.memory_space<vmem>>, vector<32x64xf32>
    %cst = arith.constant dense<0.000000e+00> : vector<8x64xf32>
    %2 = tpu.matmul %0, %1, %cst {dimension_numbers = #tpu.dot_dimension_numbers<[1], [0], [0], [1], [0, 0, 1, 1], [], []>} : vector<8x32xf32>, vector<32x64xf32>, vector<8x64xf32> -> vector<8x64xf32>
    %c0_3 = arith.constant 0 : index
    %c0_4 = arith.constant 0 : index
    %3 = vector.load %arg3[%c0_3, %c0_4] : memref<1x64xf32, #tpu.memory_space<vmem>>, vector<1x64xf32>
    %4 = vector.broadcast %3 : vector<1x64xf32> to vector<8x64xf32>
    %5 = arith.addf %2, %4 : vector<8x64xf32>
    %c0_5 = arith.constant 0 : index
    %c0_6 = arith.constant 0 : index
    %6 = vector.load %arg4[%c0_5, %c0_6] : memref<8x64xf32, #tpu.memory_space<vmem>>, vector<8x64xf32>
    tpu.vector_store %arg4[%c0_5, %c0_6], %5 {strides = array<i32>} : memref<8x64xf32, #tpu.memory_space<vmem>>, vector<8x64xf32>,
    return
  }
  func.func @transform_0(%arg0: i32) -> (i32, i32) {
    %c0_i32 = arith.constant 0 : i32
    %c0_i32_0 = arith.constant 0 : i32
    return %arg0, %c0_i32 : i32, i32
  }
  func.func @transform_1(%arg0: i32) -> (i32, i32) {
    %c0_i32 = arith.constant 0 : i32
    %c0_i32_0 = arith.constant 0 : i32
    %c0_i32_1 = arith.constant 0 : i32
    return %c0_i32, %c0_i32_0 : i32, i32
  }
  func.func @transform_2(%arg0: i32) -> (i32, i32) {
    %c0_i32 = arith.constant 0 : i32
    %c0_i32_0 = arith.constant 0 : i32
    %c0_i32_1 = arith.constant 0 : i32
    return %c0_i32, %c0_i32_0 : i32, i32
  }
  func.func @transform_3(%arg0: i32) -> (i32, i32) {
    %c0_i32 = arith.constant 0 : i32
    %c0_i32_0 = arith.constant 0 : i32
    return %arg0, %c0_i32 : i32, i32
  }
}

</mosaic_0001>

<llo_original>
// kernel: tpu_custom_call.1
$region0: #{tpu_custom_call.1}
  #allocation0 [shape = 'u32[]', space=smem, size = 0x4, offset = 0x4, fixed_abs, tag = 'smem constant byte address 0x4 - core index']
  #allocation1 [shape = 'u32[72,128]{1,0:T(1,128)}', space=vmem, size = 0x9000, scoped, tag = 'internal scratch']
  %s0 = inlined_call_operand.hbm [shape: f32[16,32], index: 0, kind: input, shape index: {}]
  %s1 = inlined_call_operand.hbm [shape: f32[32,64], index: 1, kind: input, shape index: {}]
  %s2 = inlined_call_operand.vmem [shape: f32[1,64], index: 2, kind: input, shape index: {}]
  %s3 = inlined_call_operand.hbm [shape: f32[16,64], index: 3, kind: output, shape index: {}]
  %s4 = sld [smem:[#allocation0]]
  $region53: #{tpu_custom_call.1} parent=0
    _
  %s6 = ssub.s32 1, %s4
  %s7 = scalar_select 0, %s6, %s4
  $region1: #{tpu_custom_call.1} parent=0
    #allocation2 [shape = 'u8[8192]{0}', space=vmem, size = 0x2000, scoped, tag = 'input window, operand 0']
    #allocation3 [shape = 's32[2]{0}', space=sflag, size = 0x8, scoped, tag = 'scoped memory for tpu_custom_call.1']
    #allocation4 [shape = 's32[2]{0}', space=sflag, size = 0x8, scoped, tag = 'scoped memory for tpu_custom_call.1']
    #allocation5 [shape = 'u8[16384]{0}', space=vmem, size = 0x4000, scoped, tag = 'input window, operand 1, single buffered']
    #allocation6 [shape = 's32[1]{0}', space=sflag, size = 0x4, scoped, tag = 'scoped memory for tpu_custom_call.1']
    #allocation7 [shape = 'u8[8192]{0}', space=vmem, size = 0x2000, scoped, tag = 'output window, operand 0']
    %8 = vsyncpa [#allocation3], 0
    %s9 = scalar_lea.sflag [#allocation3], 1
    %10 = vsyncpa %s9, 0
    %11 = vsyncpa [#allocation6], 0
    %12 = vsyncpa [#allocation4], 0
    %s13 = scalar_lea.sflag [#allocation4], 1
    %14 = vsyncpa %s13, 0
    loop: start=0, step=1, limit=4
    $region2: #{tpu_custom_call.1} parent=1 // loop_pre_header
      _
    $region3: #{tpu_custom_call.1} parent=1 // loop_header
      %s16 = sphi 0, %s20
      %p17 = scmp.ge.s32.totalorder %s16, 4
      %s26 = sphi 0, %s28
      %s29 = sphi 0, %s26
      %s30 = sphi 0, %s29
      %s46 = sphi 0, %s30
      %s50 = sphi 0, %s50
      %s52 = sphi 0, %s50
      %s53 = sphi 0, %s52
      %s67 = sphi 0, %s53
      %s71 = sphi 0, %s71
      %s73 = sphi 0, %s71
      %s74 = sphi 0, %s73
      %s88 = sphi 0, %s74
      %s94 = sphi 0, %s96
      %s97 = sphi 0, %s94
      %s98 = sphi 0, %s97
      %s114 = sphi 0, %s98
    $region4: #{tpu_custom_call.1} parent=1 // loop_header_branch
      %19 = sbr.rel (%p17) target = $region8
    $region5: #{tpu_custom_call.1} parent=1 // loop_body
      %s21 = ssub.s32 %s16, 1
      %s22 = ssub.s32 %s16, 2
      %s23 = sadd.s32 %s16, 1
      %s24 = ssub.s32 %s16, %s23
      %p25 = scmp.eq.s32.totalorder %s24, 0
      %s27 = sadd.s32 %s26, 1
      %s28 = scalar_select %p25, %s26, %s27
      %p31 = pneg %p25
      %p32 = scmp.eq.s32.totalorder %s16, 1
      %p33 = por %p31, %p32
      %p34 = scmp.ne.s32.totalorder %s26, %s29
      %p35 = scmp.eq.s32.totalorder %s16, 0
      %p36 = por %p34, %p35
      %p37 = scmp.ne.s32.totalorder %s26, %s29
      %p38 = scmp.eq.s32.totalorder %s21, 1
      %p39 = por %p37, %p38
      %p40 = scmp.ne.s32.totalorder %s29, %s30
      %p41 = scmp.eq.s32.totalorder %s21, 0
      %p42 = por %p40, %p41
      %p43 = scmp.ne.s32.totalorder %s29, %s30
      %p44 = scmp.eq.s32.totalorder %s22, 1
      %p45 = por %p43, %p44
      %p47 = scmp.ne.s32.totalorder %s30, %s46
      %p48 = scmp.eq.s32.totalorder %s22, 0
      %p49 = por %p47, %p48
      %s51 = sadd.s32 %s50, 1
      %p54 = scmp.eq.s32.totalorder %s16, 1
      %p55 = scmp.ne.s32.totalorder %s50, %s52
      %p56 = scmp.eq.s32.totalorder %s16, 0
      %p57 = por %p55, %p56
      %p58 = scmp.ne.s32.totalorder %s50, %s52
      %p59 = scmp.eq.s32.totalorder %s21, 1
      %p60 = por %p58, %p59
      %p61 = scmp.ne.s32.totalorder %s52, %s53
      %p62 = scmp.eq.s32.totalorder %s21, 0
      %p63 = por %p61, %p62
      %p64 = scmp.ne.s32.totalorder %s52, %s53
      %p65 = scmp.eq.s32.totalorder %s22, 1
      %p66 = por %p64, %p65
      %p68 = scmp.ne.s32.totalorder %s53, %s67
      %p69 = scmp.eq.s32.totalorder %s22, 0
      %p70 = por %p68, %p69
      %s72 = sadd.s32 %s71, 1
      %p75 = scmp.eq.s32.totalorder %s16, 1
      %p76 = scmp.ne.s32.totalorder %s71, %s73
      %p77 = scmp.eq.s32.totalorder %s16, 0
      %p78 = por %p76, %p77
      %p79 = scmp.ne.s32.totalorder %s71, %s73
      %p80 = scmp.eq.s32.totalorder %s21, 1
      %p81 = por %p79, %p80
      %p82 = scmp.ne.s32.totalorder %s73, %s74
      %p83 = scmp.eq.s32.totalorder %s21, 0
      %p84 = por %p82, %p83
      %p85 = scmp.ne.s32.totalorder %s73, %s74
      %p86 = scmp.eq.s32.totalorder %s22, 1
      %p87 = por %p85, %p86
      %p89 = scmp.ne.s32.totalorder %s74, %s88
      %p90 = scmp.eq.s32.totalorder %s22, 0
      %p91 = por %p89, %p90
      %s92 = ssub.s32 %s16, %s23
      %p93 = scmp.eq.s32.totalorder %s92, 0
      %s95 = sadd.s32 %s94, 1
      %s96 = scalar_select %p93, %s94, %s95
      %p99 = pneg %p93
      %p100 = scmp.eq.s32.totalorder %s16, 1
      %p101 = por %p99, %p100
      %p102 = scmp.ne.s32.totalorder %s94, %s97
      %p103 = scmp.eq.s32.totalorder %s16, 0
      %p104 = por %p102, %p103
      %p105 = scmp.ne.s32.totalorder %s94, %s97
      %p106 = scmp.eq.s32.totalorder %s21, 1
      %p107 = por %p105, %p106
      %p108 = scmp.ne.s32.totalorder %s97, %s98
      %p109 = scmp.eq.s32.totalorder %s21, 0
      %p110 = por %p108, %p109
      %p111 = scmp.ne.s32.totalorder %s97, %s98
      %p112 = scmp.eq.s32.totalorder %s22, 1
      %p113 = por %p111, %p112
      %p115 = scmp.ne.s32.totalorder %s98, %s114
      %p116 = scmp.eq.s32.totalorder %s22, 0
      %p117 = por %p115, %p116
      %p118 = scmp.le.s32.totalorder 1, %s16
      %p119 = scmp.lt.s32.totalorder %s16, 3
      %p120 = pnand %p118, %p119
      %p121 = pneg %p120
      // Predicated region
      $region9: #{tpu_custom_call.1} parent=5 // pred_check
        _
      $region10: #{tpu_custom_call.1} parent=5 // pred_check_branch
        %123 = sbr.rel (%p120) target = $region12
      $region11: #{tpu_custom_call.1} parent=5 // pred_region
        %s124 = ssub.s32 %s16, 1
        // Predicated region
        $region13: #{tpu_custom_call.1} parent=11 // pred_check
          %p125 = pneg %p63
        $region14: #{tpu_custom_call.1} parent=11 // pred_check_branch
          %127 = sbr.rel (%p125) target = $region16
        $region15: #{tpu_custom_call.1} parent=11 // pred_region
          %129 = vsyncadd [#allocation6], 0
          %s130 = sshll.u32 %s1, 4
          %s131 = int_to_ptr.hbm [resolvable:$true] %s130
          %s132 = sshll.u32 [#allocation5], 4
          %s133 = int_to_ptr.vmem [resolvable:$true] %s132
          %138 = dma.hbm_to_vmem [thread:$0]  %s131, 512, %s133, [#allocation6], 128, 128, 8
        $region16: #{tpu_custom_call.1} parent=11 // pred_fallthru
          _
        // Predicated region
        $region17: #{tpu_custom_call.1} parent=11 // pred_check
          %p139 = pneg %p84
        $region18: #{tpu_custom_call.1} parent=11 // pred_check_branch
          %141 = sbr.rel (%p139) target = $region20
        $region19: #{tpu_custom_call.1} parent=11 // pred_region
          _
        $region20: #{tpu_custom_call.1} parent=11 // pred_fallthru
          _
      $region12: #{tpu_custom_call.1} parent=5 // pred_fallthru
        _
      %p142 = scmp.lt.s32.totalorder %s16, 2
      // Predicated region
      $region21: #{tpu_custom_call.1} parent=5 // pred_check
        %p143 = pneg %p142
      $region22: #{tpu_custom_call.1} parent=5 // pred_check_branch
        %145 = sbr.rel (%p143) target = $region24
      $region23: #{tpu_custom_call.1} parent=5 // pred_region
        // Predicated region
        $region25: #{tpu_custom_call.1} parent=23 // pred_check
          %p146 = pneg %p36
        $region26: #{tpu_custom_call.1} parent=23 // pred_check_branch
          %148 = sbr.rel (%p146) target = $region28
        $region27: #{tpu_custom_call.1} parent=23 // pred_region
          %s149 = sand.u32 %s26, 1
          %s150 = scalar_lea.sflag [#allocation3], %s149
          %s151 = sand.u32 %s26, 1
          %s152 = smul.addr %s151, 8
          %s153 = scalar_lea.vmem [#allocation2], %s152
          %155 = vsyncadd %s150, 0
          %s156 = smul.addr %s16, 8
          %s157 = scalar_lea.hbm %s0, %s156
          %s159 = sshll.u32 %s157, 4
          %s160 = int_to_ptr.hbm [resolvable:$true] %s159
          %s161 = sshll.u32 %s153, 4
          %s162 = int_to_ptr.vmem [resolvable:$true] %s161
          %164 = dma.hbm_to_vmem [thread:$0]  %s160, 128, %s162, %s150
        $region28: #{tpu_custom_call.1} parent=23 // pred_fallthru
          _
      $region24: #{tpu_custom_call.1} parent=5 // pred_fallthru
        _
      %p165 = scmp.le.s32.totalorder 1, %s16
      %p166 = scmp.lt.s32.totalorder %s16, 3
      %p167 = pnand %p165, %p166
      %p168 = pneg %p167
      // Predicated region
      $region29: #{tpu_custom_call.1} parent=5 // pred_check
        _
      $region30: #{tpu_custom_call.1} parent=5 // pred_check_branch
        %170 = sbr.rel (%p167) target = $region32
      $region31: #{tpu_custom_call.1} parent=5 // pred_region
        %s171 = ssub.s32 %s16, 1
        %s172 = sand.u32 %s29, 1
        %s173 = scalar_lea.sflag [#allocation3], %s172
        %s174 = sand.u32 %s29, 1
        %s175 = smul.addr %s174, 8
        %s176 = scalar_lea.vmem [#allocation2], %s175
        // Predicated region
        $region33: #{tpu_custom_call.1} parent=31 // pred_check
          %p177 = pneg %p42
        $region34: #{tpu_custom_call.1} parent=31 // pred_check_branch
          %179 = sbr.rel (%p177) target = $region36
        $region35: #{tpu_custom_call.1} parent=31 // pred_region
          %181 = dma.done %s173, 128
        $region36: #{tpu_custom_call.1} parent=31 // pred_fallthru
          _
        // Predicated region
        $region37: #{tpu_custom_call.1} parent=31 // pred_check
          %p182 = pneg %p63
        $region38: #{tpu_custom_call.1} parent=31 // pred_check_branch
          %184 = sbr.rel (%p182) target = $region40
        $region39: #{tpu_custom_call.1} parent=31 // pred_region
          %186 = dma.done [#allocation6], 512
        $region40: #{tpu_custom_call.1} parent=31 // pred_fallthru
          _
        %s187 = sand.u32 %s29, 1
        %s188 = scalar_lea.sflag [#allocation3], %s187
        %s189 = sand.u32 %s29, 1
        %s190 = smul.addr %s189, 8
        %s191 = scalar_lea.vmem [#allocation2], %s190
        %p192 = pneg %p42
        %p193 = pneg %p39
        %p194 = pneg %p63
        %p195 = pneg %p60
        %p196 = pneg %p84
        %p197 = pneg %p81
        %p198 = pneg %p110
        %p199 = pneg %p107
        %s200 = sand.u32 %s97, 1
        %s201 = scalar_lea.sflag [#allocation4], %s200
        %s202 = sand.u32 %s97, 1
        %s203 = smul.addr %s202, 8
        %s204 = scalar_lea.vmem [#allocation7], %s203
        %v205 = vld [vmem:[%s176] sm:$0xff]
        %v206 = vld [vmem:[#allocation5] sm:$0xff]
        %v207 = vld [vmem:[#allocation5 + $0x8] sm:$0xff]
        %v208 = vld [vmem:[#allocation5 + $0x10] sm:$0xff]
        %v209 = vld [vmem:[#allocation5 + $0x18] sm:$0xff]
        %v210 = vld [vmem:[%s2] sm:$0x1]
        %v212 = vperm.slane %v210, 0
        %vm214 = vcmask 261120
        %v216 = vsel %vm214, %v205, 0
        %218 = vmatpush.msra.mxu0 0.0
        %219 = vmatpush.msra.mxu0 0.0
        %220 = vmatpush.msra.mxu0 0.0
        %221 = vmatpush.msra.mxu0 0.0
        %222 = vmatpush.msra.mxu0 0.0
        %223 = vmatpush.msra.mxu0 0.0
        %224 = vmatpush.msra.mxu0 0.0
        %225 = vmatpush.msra.mxu0 0.0
        %226 = vmatpush.msra.mxu0 0.0
        %227 = vmatpush.msra.mxu0 0.0
        %228 = vmatpush.msra.mxu0 0.0
        %229 = vmatpush.msra.mxu0 0.0
        %230 = vmatpush.msra.mxu0 %v209
        %231 = vmatpush.msra.mxu0 %v208
        %232 = vmatpush.msra.mxu0 %v207
        %233 = vmatpush.msra.mxu0 %v206
        %234 = vmatmul.f32.gmra.mxu0 %v216
        %v235 = vpop.f32.mrf.mxu0
        %v236 = vadd.f32 %v212, %v235
        %237 = vdwg.mxu0
        %vm238 = vcmask 523264
        %239 = vst.msk [vmem:[%s204] sm:$0xff] %vm238, %v236
        %s240 = sand.u32 %s97, 1
        %s241 = scalar_lea.sflag [#allocation4], %s240
        %s242 = sand.u32 %s97, 1
        %s243 = smul.addr %s242, 8
        %s244 = scalar_lea.vmem [#allocation7], %s243
        // Predicated region
        $region41: #{tpu_custom_call.1} parent=31 // pred_check
          %p245 = pneg %p107
        $region42: #{tpu_custom_call.1} parent=31 // pred_check_branch
          %247 = sbr.rel (%p245) target = $region44
        $region43: #{tpu_custom_call.1} parent=31 // pred_region
          %249 = vsyncadd %s241, 0
          %s250 = smul.addr %s21, 8
          %s251 = scalar_lea.hbm %s3, %s250
          %s253 = sshll.u32 %s244, 4
          %s254 = int_to_ptr.vmem [resolvable:$true] %s253
          %s255 = sshll.u32 %s251, 4
          %s256 = int_to_ptr.hbm [resolvable:$true] %s255
          %258 = dma.vmem_to_hbm [thread:$0]  %s254, 128, %s256, %s241
        $region44: #{tpu_custom_call.1} parent=31 // pred_fallthru
          _
      $region32: #{tpu_custom_call.1} parent=5 // pred_fallthru
        _
      %p259 = scmp.le.s32.totalorder 2, %s16
      // Predicated region
      $region45: #{tpu_custom_call.1} parent=5 // pred_check
        %p260 = pneg %p259
      $region46: #{tpu_custom_call.1} parent=5 // pred_check_branch
        %262 = sbr.rel (%p260) target = $region48
      $region47: #{tpu_custom_call.1} parent=5 // pred_region
        %s263 = ssub.s32 %s16, 2
        // Predicated region
        $region49: #{tpu_custom_call.1} parent=47 // pred_check
          %p264 = pneg %p113
        $region50: #{tpu_custom_call.1} parent=47 // pred_check_branch
          %266 = sbr.rel (%p264) target = $region52
        $region51: #{tpu_custom_call.1} parent=47 // pred_region
          %s267 = sand.u32 %s98, 1
          %s268 = scalar_lea.sflag [#allocation4], %s267
          %s269 = sand.u32 %s98, 1
          %s270 = smul.addr %s269, 8
          %s271 = scalar_lea.vmem [#allocation7], %s270
          %273 = dma.done %s268, 128
        $region52: #{tpu_custom_call.1} parent=47 // pred_fallthru
          _
      $region48: #{tpu_custom_call.1} parent=5 // pred_fallthru
        _
    $region6: #{tpu_custom_call.1} parent=1 // loop_footer
      %s20 = sadd.s32 1, %s16
    $region7: #{tpu_custom_call.1} parent=1 // loop_footer_branch
      %15 = sbr.rel target = $region3
    $region8: #{tpu_custom_call.1} parent=1 // loop_exit
      _
    %274 = vsyncpa [#allocation3], 1
    %s275 = scalar_lea.sflag [#allocation3], 1
    %276 = vsyncpa %s275, 1
    %277 = vsyncpa [#allocation6], 1
    %278 = vsyncpa [#allocation4], 1
    %s279 = scalar_lea.sflag [#allocation4], 1
    %280 = vsyncpa %s279, 1

</llo_original>
